<compile_context>
chip_gen: v6e
topology: v6e:2x2x1
jax: 0.10.0
libtpu: 0.0.40
codegen_flags: <defaults>
</compile_context>

<pallas_src>
import jax
import jax.numpy as jnp
from jax import lax
from jax.experimental import pallas as pl
from jax.experimental.pallas import tpu as pltpu


def _round_up(x, m):
    return (x + m - 1) // m * m


def _pick_tl(lp, c, budget_bytes=2 * 1024 * 1024):
    """Largest multiple of 128 that divides lp and keeps one f32 block <= budget."""
    cap = max(128, (budget_bytes // (4 * max(c, 1))) // 128 * 128)
    t = max(128, (min(lp, cap) // 128) * 128)
    while lp % t:
        t -= 128
    return t


# ----------------------------------------------------------------------------
# Fused kernel: z = W @ x + b ; gate = sigmoid(z) ; out = x * gate
# ----------------------------------------------------------------------------

def _pa_kernel(x_ref, w_ref, b_ref, o_ref):
    # x_ref: (1, C, TL)   w_ref: (C, C)   b_ref: (C, 1)   o_ref: (1, C, TL)
    x = x_ref[0]                                   # (C, TL) f32
    w = w_ref[...]                                 # (C, C)  f32
    b = b_ref[...]                                 # (C, 1)  f32

    # 1x1 conv == channel matmul: z[co, l] = sum_ci w[co, ci] * x[ci, l]
    z = lax.dot_general(w, x, (((1,), (0,)), ((), ())),
                        preferred_element_type=jnp.float32) + b

    # Numerically stable sigmoid using EUP exp + approximate reciprocal.
    e = jnp.exp(-jnp.abs(z))
    r = pl.reciprocal(1.0 + e, approx=True)
    gate = jnp.where(z >= 0.0, r, e * r)

    o_ref[0] = (x * gate).astype(o_ref.dtype)      # fused gating multiply


def pa_forward(x_nchw, conv1_w, conv1_b):
    """PA forward: x * sigmoid(Conv2d(C, C, kernel=1, bias=True)(x)).

    x_nchw : (N, C, H, W) float32
    conv1_w: (C, C, 1, 1) float32  (PyTorch OIHW layout)
    conv1_b: (C,)         float32
    """
    N, C, H, W = x_nchw.shape
    L = H * W
    xr = x_nchw.reshape(N, C, L)                   # contiguous view, no transpose

    Lp = _round_up(L, 128)
    if Lp != L:
        xr = jnp.pad(xr, ((0, 0), (0, 0), (0, Lp - L)))

    tl = _pick_tl(Lp, C)
    w2 = conv1_w.reshape(C, C).astype(jnp.float32)
    b2 = conv1_b.reshape(C, 1).astype(jnp.float32)

    grid = (N, Lp // tl)
    out = pl.pallas_call(
        _pa_kernel,
        out_shape=jax.ShapeDtypeStruct((N, C, Lp), jnp.float32),
        grid_spec=pltpu.PrefetchScalarGridSpec(
            num_scalar_prefetch=0,
            grid=grid,
            in_specs=[
                pl.BlockSpec((1, C, tl), lambda n, l: (n, 0, l)),   # x tile
                pl.BlockSpec((C, C), lambda n, l: (0, 0)),          # weight (resident)
                pl.BlockSpec((C, 1), lambda n, l: (0, 0)),          # bias   (resident)
            ],
            out_specs=pl.BlockSpec((1, C, tl), lambda n, l: (n, 0, l)),
        ),
        compiler_params=pltpu.CompilerParams(
            dimension_semantics=("parallel", "parallel")),
    )(xr, w2, b2)

    if Lp != L:
        out = out[:, :, :L]
    return out.reshape(N, C, H, W)


# ----------------------------------------------------------------------------
# Parameter init mirroring PA.__init__ (kaiming_normal_ weight, default bias)
# ----------------------------------------------------------------------------

def init_params(key, channel):
    wkey, bkey = jax.random.split(key)
    fan_in = channel * 1 * 1
    std = (2.0 / fan_in) ** 0.5                    # kaiming_normal_, fan_in, relu gain
    w = std * jax.random.normal(wkey, (channel, channel, 1, 1), jnp.float32)
    bound = 1.0 / (fan_in ** 0.5)                  # PyTorch Conv2d default bias init
    b = bound * (2.0 * jax.random.uniform(bkey, (channel,), jnp.float32) - 1.0)
    return w, b


def _pa_reference(x, w, b):
    """Pure-JAX reference for a sanity check."""
    z = jnp.einsum("oc,nchw->nohw", w.reshape(w.shape[0], w.shape[1]), x)
    z = z + b.reshape(1, -1, 1, 1)
    return x * jax.nn.sigmoid(z)


if __name__ == "__main__":
    key = jax.random.PRNGKey(0)
    pkey, xkey = jax.random.split(key)

    channel = 4
    conv1_w, conv1_b = init_params(pkey, channel)
    x = jax.random.normal(xkey, (2, channel, 16, 16), jnp.float32)

    fwd = jax.jit(pa_forward)
    y = fwd(x, conv1_w, conv1_b)
    jax.block_until_ready(y)

    assert y.shape == x.shape and y.dtype == jnp.float32
    y_ref = _pa_reference(x, conv1_w, conv1_b)
    assert jnp.allclose(y, y_ref, atol=1e-2, rtol=1e-2), "mismatch vs reference"

    print("KERNEL_OK")
</pallas_src>

<mosaic_0001>
module attributes {stable_mosaic.version = 11 : i64} {
  func.func @_pa_kernel(%arg0: i32, %arg1: i32, %arg2: memref<1x4x256xf32, #tpu.memory_space<vmem>>, %arg3: memref<4x4xf32, #tpu.memory_space<vmem>>, %arg4: memref<4x1xf32, #tpu.memory_space<vmem>>, %arg5: memref<1x4x256xf32, #tpu.memory_space<vmem>>) attributes {dimension_semantics = [#tpu.dimension_semantics<parallel>, #tpu.dimension_semantics<parallel>], iteration_bounds = array<i64: 2, 1>, scalar_prefetch = 0 : i64, scratch_operands = 0 : i64, tpu.core_type = #tpu.core_type<tc>, window_params = [{transform_indices = @transform_0, window_bounds = array<i64: 1, 4, 256>}, {pipeline_mode = #tpu.pipeline_mode<synchronous>, transform_indices = @transform_1, window_bounds = array<i64: 4, 4>}, {pipeline_mode = #tpu.pipeline_mode<synchronous>, transform_indices = @transform_2, window_bounds = array<i64: 4, 1>}, {transform_indices = @transform_3, window_bounds = array<i64: 1, 4, 256>}]} {
    %c0 = arith.constant 0 : index
    %c0_0 = arith.constant 0 : index
    %c0_1 = arith.constant 0 : index
    %0 = vector.load %arg2[%c0, %c0_0, %c0_1] : memref<1x4x256xf32, #tpu.memory_space<vmem>>, vector<1x4x256xf32>
    %1 = vector.shape_cast %0 : vector<1x4x256xf32> to vector<4x256xf32>
    %c0_2 = arith.constant 0 : index
    %c0_3 = arith.constant 0 : index
    %2 = vector.load %arg3[%c0_2, %c0_3] : memref<4x4xf32, #tpu.memory_space<vmem>>, vector<4x4xf32>
    %c0_4 = arith.constant 0 : index
    %c0_5 = arith.constant 0 : index
    %3 = vector.load %arg4[%c0_4, %c0_5] : memref<4x1xf32, #tpu.memory_space<vmem>>, vector<4x1xf32>
    %cst = arith.constant dense<0.000000e+00> : vector<4x256xf32>
    %4 = tpu.matmul %2, %1, %cst {dimension_numbers = #tpu.dot_dimension_numbers<[1], [0], [0], [1], [0, 0, 1, 1], [], []>} : vector<4x4xf32>, vector<4x256xf32>, vector<4x256xf32> -> vector<4x256xf32>
    %5 = vector.broadcast %3 : vector<4x1xf32> to vector<4x256xf32>
    %6 = arith.addf %4, %5 : vector<4x256xf32>
    %7 = math.absf %6 : vector<4x256xf32>
    %cst_6 = arith.constant 0.000000e+00 : f32
    %8 = vector.broadcast %cst_6 : f32 to vector<4x256xf32>
    %9 = arith.subf %8, %7 : vector<4x256xf32>
    %10 = math.exp %9 : vector<4x256xf32>
    %cst_7 = arith.constant 1.000000e+00 : f32
    %11 = vector.broadcast %cst_7 : f32 to vector<4x256xf32>
    %12 = arith.addf %11, %10 : vector<4x256xf32>
    %13 = tpu.reciprocal %12 {approx = true} : vector<4x256xf32> -> vector<4x256xf32>
    %cst_8 = arith.constant 0.000000e+00 : f32
    %14 = vector.broadcast %cst_8 : f32 to vector<4x256xf32>
    %15 = arith.cmpf oge, %6, %14 : vector<4x256xf32>
    %16 = arith.mulf %10, %13 : vector<4x256xf32>
    %17 = arith.select %15, %13, %16 : vector<4x256xi1>, vector<4x256xf32>
    %18 = arith.mulf %1, %17 : vector<4x256xf32>
    %c0_9 = arith.constant 0 : index
    %c0_10 = arith.constant 0 : index
    %c0_11 = arith.constant 0 : index
    %19 = vector.load %arg5[%c0_9, %c0_10, %c0_11] : memref<1x4x256xf32, #tpu.memory_space<vmem>>, vector<1x4x256xf32>
    %20 = vector.shape_cast %19 : vector<1x4x256xf32> to vector<4x256xf32>
    %21 = vector.shape_cast %18 : vector<4x256xf32> to vector<1x4x256xf32>
    tpu.vector_store %arg5[%c0_9, %c0_10, %c0_11], %21 {strides = array<i32>} : memref<1x4x256xf32, #tpu.memory_space<vmem>>, vector<1x4x256xf32>,
    return
  }
  func.func @transform_0(%arg0: i32, %arg1: i32) -> (i32, i32, i32) {
    %c0_i32 = arith.constant 0 : i32
    %c0_i32_0 = arith.constant 0 : i32
    return %arg0, %c0_i32, %arg1 : i32, i32, i32
  }
  func.func @transform_1(%arg0: i32, %arg1: i32) -> (i32, i32) {
    %c0_i32 = arith.constant 0 : i32
    %c0_i32_0 = arith.constant 0 : i32
    %c0_i32_1 = arith.constant 0 : i32
    return %c0_i32, %c0_i32_0 : i32, i32
  }
  func.func @transform_2(%arg0: i32, %arg1: i32) -> (i32, i32) {
    %c0_i32 = arith.constant 0 : i32
    %c0_i32_0 = arith.constant 0 : i32
    %c0_i32_1 = arith.constant 0 : i32
    return %c0_i32, %c0_i32_0 : i32, i32
  }
  func.func @transform_3(%arg0: i32, %arg1: i32) -> (i32, i32, i32) {
    %c0_i32 = arith.constant 0 : i32
    %c0_i32_0 = arith.constant 0 : i32
    return %arg0, %c0_i32, %arg1 : i32, i32, i32
  }
}

</mosaic_0001>

<llo_original>
// kernel: pa_forward.1
$region0: #{pa_forward.1}
  #allocation0 [shape = 'u32[]', space=smem, size = 0x4, offset = 0x4, fixed_abs, tag = 'smem constant byte address 0x4 - core index']
  #allocation1 [shape = 'u32[144,128]{1,0:T(1,128)}', space=vmem, size = 0x12000, scoped, tag = 'internal scratch']
  %s0 = inlined_call_operand.vmem [shape: f32[2,4,256], index: 0, kind: input, shape index: {}]
  %s1 = inlined_call_operand.vmem [shape: f32[4,4], index: 1, kind: input, shape index: {}]
  %s2 = inlined_call_operand.vmem [shape: f32[4,1], index: 2, kind: input, shape index: {}]
  %s3 = inlined_call_operand.vmem [shape: f32[2,4,256], index: 3, kind: output, shape index: {}]
  %s4 = sld [smem:[#allocation0]]
  $region45: #{pa_forward.1} parent=0
    _
  %s6 = ssub.s32 1, %s4
  %s7 = scalar_select 0, %s6, %s4
  loop: start=0, step=1, limit=4
  $region2: #{pa_forward.1} parent=0 // loop_pre_header
    _
  $region3: #{pa_forward.1} parent=0 // loop_header
    %s9 = sphi 0, %s13
    %p10 = scmp.ge.s32.totalorder %s9, 4
    %s16 = sphi 0, %s28
    %s17 = sphi 0, %s24
    %s18 = sphi 0, %s16
    %s19 = sphi 0, %s17
    %s20 = sphi 0, %s18
    %s21 = sphi 0, %s19
    %s33 = sphi 0, %s35
    %s36 = sphi 0, %s33
    %s37 = sphi 0, %s36
    %s53 = sphi 0, %s37
    %s57 = sphi 0, %s57
    %s59 = sphi 0, %s57
    %s60 = sphi 0, %s59
    %s74 = sphi 0, %s60
    %s78 = sphi 0, %s78
    %s80 = sphi 0, %s78
    %s81 = sphi 0, %s80
    %s95 = sphi 0, %s81
    %s103 = sphi 0, %s105
    %s106 = sphi 0, %s103
    %s107 = sphi 0, %s106
    %s123 = sphi 0, %s107
  $region4: #{pa_forward.1} parent=0 // loop_header_branch
    %12 = sbr.rel (%p10) target = $region8
  $region5: #{pa_forward.1} parent=0 // loop_body
    %s14 = ssub.s32 %s9, 1
    %s15 = ssub.s32 %s9, 2
    %s22 = sadd.s32 1, %s17
    %p23 = scmp.ge.s32.totalorder %s22, 1
    %s24 = scalar_select %p23, 0, %s22
    %s25 = sadd.s32 1, %s16
    %s26 = scalar_select %p23, %s25, %s16
    %p27 = scmp.ge.s32.totalorder %s26, 2
    %s28 = scalar_select %p27, 0, %s26
    %s29 = ssub.s32 %s16, %s28
    %s30 = ssub.s32 %s17, %s24
    %s31 = sor.u32 %s29, %s30
    %p32 = scmp.eq.s32.totalorder %s31, 0
    %s34 = sadd.s32 %s33, 1
    %s35 = scalar_select %p32, %s33, %s34
    %p38 = pneg %p32
    %p39 = scmp.eq.s32.totalorder %s9, 1
    %p40 = por %p38, %p39
    %p41 = scmp.ne.s32.totalorder %s33, %s36
    %p42 = scmp.eq.s32.totalorder %s9, 0
    %p43 = por %p41, %p42
    %p44 = scmp.ne.s32.totalorder %s33, %s36
    %p45 = scmp.eq.s32.totalorder %s14, 1
    %p46 = por %p44, %p45
    %p47 = scmp.ne.s32.totalorder %s36, %s37
    %p48 = scmp.eq.s32.totalorder %s14, 0
    %p49 = por %p47, %p48
    %p50 = scmp.ne.s32.totalorder %s36, %s37
    %p51 = scmp.eq.s32.totalorder %s15, 1
    %p52 = por %p50, %p51
    %p54 = scmp.ne.s32.totalorder %s37, %s53
    %p55 = scmp.eq.s32.totalorder %s15, 0
    %p56 = por %p54, %p55
    %s58 = sadd.s32 %s57, 1
    %p61 = scmp.eq.s32.totalorder %s9, 1
    %p62 = scmp.ne.s32.totalorder %s57, %s59
    %p63 = scmp.eq.s32.totalorder %s9, 0
    %p64 = por %p62, %p63
    %p65 = scmp.ne.s32.totalorder %s57, %s59
    %p66 = scmp.eq.s32.totalorder %s14, 1
    %p67 = por %p65, %p66
    %p68 = scmp.ne.s32.totalorder %s59, %s60
    %p69 = scmp.eq.s32.totalorder %s14, 0
    %p70 = por %p68, %p69
    %p71 = scmp.ne.s32.totalorder %s59, %s60
    %p72 = scmp.eq.s32.totalorder %s15, 1
    %p73 = por %p71, %p72
    %p75 = scmp.ne.s32.totalorder %s60, %s74
    %p76 = scmp.eq.s32.totalorder %s15, 0
    %p77 = por %p75, %p76
    %s79 = sadd.s32 %s78, 1
    %p82 = scmp.eq.s32.totalorder %s9, 1
    %p83 = scmp.ne.s32.totalorder %s78, %s80
    %p84 = scmp.eq.s32.totalorder %s9, 0
    %p85 = por %p83, %p84
    %p86 = scmp.ne.s32.totalorder %s78, %s80
    %p87 = scmp.eq.s32.totalorder %s14, 1
    %p88 = por %p86, %p87
    %p89 = scmp.ne.s32.totalorder %s80, %s81
    %p90 = scmp.eq.s32.totalorder %s14, 0
    %p91 = por %p89, %p90
    %p92 = scmp.ne.s32.totalorder %s80, %s81
    %p93 = scmp.eq.s32.totalorder %s15, 1
    %p94 = por %p92, %p93
    %p96 = scmp.ne.s32.totalorder %s81, %s95
    %p97 = scmp.eq.s32.totalorder %s15, 0
    %p98 = por %p96, %p97
    %s99 = ssub.s32 %s16, %s28
    %s100 = ssub.s32 %s17, %s24
    %s101 = sor.u32 %s99, %s100
    %p102 = scmp.eq.s32.totalorder %s101, 0
    %s104 = sadd.s32 %s103, 1
    %s105 = scalar_select %p102, %s103, %s104
    %p108 = pneg %p102
    %p109 = scmp.eq.s32.totalorder %s9, 1
    %p110 = por %p108, %p109
    %p111 = scmp.ne.s32.totalorder %s103, %s106
    %p112 = scmp.eq.s32.totalorder %s9, 0
    %p113 = por %p111, %p112
    %p114 = scmp.ne.s32.totalorder %s103, %s106
    %p115 = scmp.eq.s32.totalorder %s14, 1
    %p116 = por %p114, %p115
    %p117 = scmp.ne.s32.totalorder %s106, %s107
    %p118 = scmp.eq.s32.totalorder %s14, 0
    %p119 = por %p117, %p118
    %p120 = scmp.ne.s32.totalorder %s106, %s107
    %p121 = scmp.eq.s32.totalorder %s15, 1
    %p122 = por %p120, %p121
    %p124 = scmp.ne.s32.totalorder %s107, %s123
    %p125 = scmp.eq.s32.totalorder %s15, 0
    %p126 = por %p124, %p125
    %p127 = scmp.le.s32.totalorder 1, %s9
    %p128 = scmp.lt.s32.totalorder %s9, 3
    %p129 = pnand %p127, %p128
    %p130 = pneg %p129
    // Predicated region
    $region9: #{pa_forward.1} parent=5 // pred_check
      _
    $region10: #{pa_forward.1} parent=5 // pred_check_branch
      %132 = sbr.rel (%p129) target = $region12
    $region11: #{pa_forward.1} parent=5 // pred_region
      %s133 = ssub.s32 %s9, 1
      // Predicated region
      $region13: #{pa_forward.1} parent=11 // pred_check
        %p134 = pneg %p70
      $region14: #{pa_forward.1} parent=11 // pred_check_branch
        %136 = sbr.rel (%p134) target = $region16
      $region15: #{pa_forward.1} parent=11 // pred_region
        _
      $region16: #{pa_forward.1} parent=11 // pred_fallthru
        _
      // Predicated region
      $region17: #{pa_forward.1} parent=11 // pred_check
        %p137 = pneg %p91
      $region18: #{pa_forward.1} parent=11 // pred_check_branch
        %139 = sbr.rel (%p137) target = $region20
      $region19: #{pa_forward.1} parent=11 // pred_region
        _
      $region20: #{pa_forward.1} parent=11 // pred_fallthru
        _
    $region12: #{pa_forward.1} parent=5 // pred_fallthru
      _
    %p140 = scmp.lt.s32.totalorder %s9, 2
    // Predicated region
    $region21: #{pa_forward.1} parent=5 // pred_check
      %p141 = pneg %p140
    $region22: #{pa_forward.1} parent=5 // pred_check_branch
      %143 = sbr.rel (%p141) target = $region24
    $region23: #{pa_forward.1} parent=5 // pred_region
      // Predicated region
      $region25: #{pa_forward.1} parent=23 // pred_check
        %p144 = pneg %p43
      $region26: #{pa_forward.1} parent=23 // pred_check_branch
        %146 = sbr.rel (%p144) target = $region28
      $region27: #{pa_forward.1} parent=23 // pred_region
        %s147 = smul.u32 2, %s17
        %p148 = scmp.lt.s32.totalorder %s16, 1
        %s149 = scalar_select %p148, %s16, 1
        %p150 = scmp.lt.s32.totalorder %s147, 1
        %s151 = scalar_select %p150, %s147, 1
        %s152 = smul.addr %s149, 2
        %s153 = sadd.s32 %s151, %s152
        %s154 = smul.addr %s153, 4
        %s155 = scalar_lea.vmem %s0, %s154
        %s156 = smul.u32 2, %s17
      $region28: #{pa_forward.1} parent=23 // pred_fallthru
        _
    $region24: #{pa_forward.1} parent=5 // pred_fallthru
      _
    %p157 = scmp.le.s32.totalorder 1, %s9
    %p158 = scmp.lt.s32.totalorder %s9, 3
    %p159 = pnand %p157, %p158
    %p160 = pneg %p159
    // Predicated region
    $region29: #{pa_forward.1} parent=5 // pred_check
      _
    $region30: #{pa_forward.1} parent=5 // pred_check_branch
      %162 = sbr.rel (%p159) target = $region32
    $region31: #{pa_forward.1} parent=5 // pred_region
      %s163 = ssub.s32 %s9, 1
      %s164 = smul.u32 2, %s19
      %p165 = scmp.lt.s32.totalorder %s18, 1
      %s166 = scalar_select %p165, %s18, 1
      %p167 = scmp.lt.s32.totalorder %s164, 1
      %s168 = scalar_select %p167, %s164, 1
      %s169 = smul.addr %s166, 2
      %s170 = sadd.s32 %s168, %s169
      %s171 = smul.addr %s170, 4
      %s172 = scalar_lea.vmem %s0, %s171
      %p173 = pneg %p49
      %p174 = pneg %p46
      %p175 = pneg %p70
      %p176 = pneg %p67
      %p177 = pneg %p91
      %p178 = pneg %p88
      %p179 = pneg %p119
      %p180 = pneg %p116
      %s181 = smul.u32 2, %s19
      %p182 = scmp.lt.s32.totalorder %s18, 1
      %s183 = scalar_select %p182, %s18, 1
      %p184 = scmp.lt.s32.totalorder %s181, 1
      %s185 = scalar_select %p184, %s181, 1
      %s186 = smul.addr %s183, 2
      %s187 = sadd.s32 %s185, %s186
      %s188 = smul.addr %s187, 4
      %s189 = scalar_lea.vmem %s3, %s188
      %s190 = smul.u32 2, %s19
      %p191 = scmp.lt.s32.totalorder %s18, 1
      %s192 = scalar_select %p191, %s18, 1
      %p193 = scmp.lt.s32.totalorder %s190, 1
      %s194 = scalar_select %p193, %s190, 1
      %s195 = smul.addr %s192, 2
      %s196 = sadd.s32 %s194, %s195
      %s197 = smul.addr %s196, 4
      %s198 = scalar_lea.vmem %s0, %s197
      %s199 = smul.u32 2, %s19
      %s200 = smul.u32 2, %s19
      %p201 = scmp.lt.s32.totalorder %s18, 1
      %s202 = scalar_select %p201, %s18, 1
      %p203 = scmp.lt.s32.totalorder %s200, 1
      %s204 = scalar_select %p203, %s200, 1
      %s205 = smul.addr %s202, 2
      %s206 = sadd.s32 %s204, %s205
      %s207 = smul.addr %s206, 4
      %s208 = scalar_lea.vmem %s3, %s207
      %s209 = smul.u32 2, %s19
      %v210 = vld [vmem:[%s198] sm:$0xff]
      %v211 = vld [vmem:[%s1] sm:$0xf]
      %v212 = vld [vmem:[%s2] sm:$0xf]
      %214 = vset.pattern.permute.xlu0 0
      %215 = vperm.xlu0 %214, %v212
      %v216 = vpop.permute.xlu0 %215
      %v219 = vcombine.high %v210, %v210
      %vm220 = vcmask 31744
      %v222 = vsel %vm220, %v211, 0
      %vm224 = vcmask 1043456
      %v225 = vsel %vm224, %v210, 0
      %v227 = vsel %vm224, %v219, 0
      %229 = vmatprep.subr.mxu0 0.0
      %230 = vmatpush1.msra.mxu0 0.0
      %231 = vmatprep.subr.mxu0 0.0
      %232 = vmatpush1.msra.mxu0 0.0
      %233 = vmatprep.subr.mxu0 0.0
      %234 = vmatpush1.msra.mxu0 0.0
      %235 = vmatprep.subr.mxu0 0.0
      %236 = vmatpush1.msra.mxu0 0.0
      %237 = vmatprep.subr.mxu0 0.0
      %238 = vmatpush1.msra.mxu0 0.0
      %239 = vmatprep.subr.mxu0 0.0
      %240 = vmatpush1.msra.mxu0 0.0
      %241 = vmatprep.subr.mxu0 0.0
      %242 = vmatpush1.msra.mxu0 0.0
      %243 = vmatprep.subr.mxu0 0.0
      %244 = vmatpush1.msra.mxu0 0.0
      %245 = vmatprep.subr.mxu0 0.0
      %246 = vmatpush1.msra.mxu0 0.0
      %247 = vmatprep.subr.mxu0 0.0
      %248 = vmatpush1.msra.mxu0 0.0
      %249 = vmatprep.subr.mxu0 0.0
      %250 = vmatpush1.msra.mxu0 0.0
      %251 = vmatprep.subr.mxu0 0.0
      %252 = vmatpush1.msra.mxu0 0.0
      %253 = vmatprep.subr.mxu0 0.0
      %254 = vmatpush1.msra.mxu0 0.0
      %255 = vmatprep.subr.mxu0 0.0
      %256 = vmatpush1.msra.mxu0 0.0
      %257 = vmatprep.subr.mxu0 0.0
      %258 = vmatpush1.msra.mxu0 0.0
      %259 = vmatprep.subr.mxu0 %v227
      %260 = vmatpush1.msra.mxu0 %v225
      %261 = vmatprep.subr.mxu0 0.0
      %262 = vmatpush2.msra.mxu0 0.0
      %263 = vmatprep.subr.mxu0 0.0
      %264 = vmatpush2.msra.mxu0 0.0
      %265 = vmatprep.subr.mxu0 0.0
      %266 = vmatpush2.msra.mxu0 0.0
      %267 = vmatprep.subr.mxu0 0.0
      %268 = vmatpush2.msra.mxu0 0.0
      %269 = vmatprep.subr.mxu0 0.0
      %270 = vmatpush2.msra.mxu0 0.0
      %271 = vmatprep.subr.mxu0 0.0
      %272 = vmatpush2.msra.mxu0 0.0
      %273 = vmatprep.subr.mxu0 0.0
      %274 = vmatpush2.msra.mxu0 0.0
      %275 = vmatprep.subr.mxu0 0.0
      %276 = vmatpush2.msra.mxu0 0.0
      %277 = vmatprep.subr.mxu0 0.0
      %278 = vmatpush2.msra.mxu0 0.0
      %279 = vmatprep.subr.mxu0 0.0
      %280 = vmatpush2.msra.mxu0 0.0
      %281 = vmatprep.subr.mxu0 0.0
      %282 = vmatpush2.msra.mxu0 0.0
      %283 = vmatprep.subr.mxu0 0.0
      %284 = vmatpush2.msra.mxu0 0.0
      %285 = vmatprep.subr.mxu0 0.0
      %286 = vmatpush2.msra.mxu0 0.0
      %287 = vmatprep.subr.mxu0 0.0
      %288 = vmatpush2.msra.mxu0 0.0
      %289 = vmatprep.subr.mxu0 0.0
      %290 = vmatpush2.msra.mxu0 0.0
      %291 = vmatprep.subr.mxu0 0.0
      %292 = vmatpush2.msra.mxu0 0.0
      %293 = vmatprep.mubr.f32.mxu0 0.0
      %294 = vmatmul.mubr.f32.gmra.mxu0 %v222
      %v295 = vpop.f32.mrf.mxu0
      %v296 = vadd.f32 %v216, %v295
      %v297 = vpop.f32.mrf.mxu0
      %v298 = vadd.f32 %v216, %v297
      %299 = vdwg.mxu0
      %v300 = vand.u32 2147483647, %v296
      %v301 = vand.u32 2147483647, %v298
      %v302 = vsub.f32 0.0, %v300
      %v303 = vsub.f32 0.0, %v301
      %v304 = vmul.f32 %v302, 1.442695
      %v305 = vpow.pop %v304
      %v306 = vmul.f32 %v303, 1.442695
      %v307 = vpow.pop %v306
      %v308 = vadd.f32 %v305, 1.0
      %v309 = vadd.f32 %v307, 1.0
      %v310 = vrcp.pop %v308
      %v311 = vrcp.pop %v309
      %vm312 = vcmp.ge.f32.partialorder %v296, 0.0
      %vm313 = vcmp.ge.f32.partialorder %v298, 0.0
      %v314 = vmul.f32 %v305, %v310
      %v315 = vmul.f32 %v307, %v311
      %v316 = vsel %vm312, %v310, %v314
      %v317 = vsel %vm313, %v311, %v315
      %v320 = vcombine.low %v316, %v317
      %v322 = vmul.f32 %v210, %v320
      %323 = vst [vmem:[%s208] sm:$0xff] %v322
      %s324 = smul.u32 2, %s19
      %p325 = scmp.lt.s32.totalorder %s18, 1
      %s326 = scalar_select %p325, %s18, 1
      %p327 = scmp.lt.s32.totalorder %s324, 1
      %s328 = scalar_select %p327, %s324, 1
      %s329 = smul.addr %s326, 2
      %s330 = sadd.s32 %s328, %s329
      %s331 = smul.addr %s330, 4
      %s332 = scalar_lea.vmem %s3, %s331
      // Predicated region
      $region33: #{pa_forward.1} parent=31 // pred_check
        %p333 = pneg %p116
      $region34: #{pa_forward.1} parent=31 // pred_check_branch
        %335 = sbr.rel (%p333) target = $region36
      $region35: #{pa_forward.1} parent=31 // pred_region
        %s336 = smul.u32 2, %s19
      $region36: #{pa_forward.1} parent=31 // pred_fallthru
        _
    $region32: #{pa_forward.1} parent=5 // pred_fallthru
      _
    %p337 = scmp.le.s32.totalorder 2, %s9
    // Predicated region
    $region37: #{pa_forward.1} parent=5 // pred_check
      %p338 = pneg %p337
    $region38: #{pa_forward.1} parent=5 // pred_check_branch
      %340 = sbr.rel (%p338) target = $region40
    $region39: #{pa_forward.1} parent=5 // pred_region
      %s341 = ssub.s32 %s9, 2
      // Predicated region
      $region41: #{pa_forward.1} parent=39 // pred_check
        %p342 = pneg %p122
      $region42: #{pa_forward.1} parent=39 // pred_check_branch
        %344 = sbr.rel (%p342) target = $region44
      $region43: #{pa_forward.1} parent=39 // pred_region
        %s345 = smul.u32 2, %s21
        %p346 = scmp.lt.s32.totalorder %s20, 1
        %s347 = scalar_select %p346, %s20, 1
        %p348 = scmp.lt.s32.totalorder %s345, 1
        %s349 = scalar_select %p348, %s345, 1
        %s350 = smul.addr %s347, 2
        %s351 = sadd.s32 %s349, %s350
        %s352 = smul.addr %s351, 4
        %s353 = scalar_lea.vmem %s3, %s352
      $region44: #{pa_forward.1} parent=39 // pred_fallthru
        _
    $region40: #{pa_forward.1} parent=5 // pred_fallthru
      _
  $region6: #{pa_forward.1} parent=0 // loop_footer
    %s13 = sadd.s32 1, %s9
  $region7: #{pa_forward.1} parent=0 // loop_footer_branch
    %8 = sbr.rel target = $region3
  $region8: #{pa_forward.1} parent=0 // loop_exit
    _

</llo_original>
